<compile_context>
chip_gen: v6e
topology: v6e:2x2x1
jax: 0.10.0
libtpu: 0.0.40
codegen_flags: <defaults>
</compile_context>

<pallas_src>
import functools

import jax
import jax.numpy as jnp
from jax import lax
from jax.experimental import pallas as pl
from jax.experimental.pallas import tpu as pltpu


_ONE_HOT_MAX_VOCAB = 1024      # above this the one-hot compute/VMEM cost dominates
_ROWS_PER_STORE = 8            # sublane-dense (8, D) stores in the gather path


def _round_up(x, m):
    return (x + m - 1) // m * m


def _vmem_capacity_bytes():
    """Physical VMEM per TensorCore; conservative fallback if the query fails."""
    try:
        return int(pltpu.get_tpu_info().vmem_capacity_bytes)
    except Exception:
        return 64 * 1024 * 1024       # v7x — smallest current generation


# ---------------------------------------------------------------------------
# Kernel bodies
# ---------------------------------------------------------------------------

def _embedding_onehot_kernel(ids_ref, emb_ref, out_ref, *, vocab_size):
    """Small-vocab path: (T, V) one-hot @ (V, D) on the MXU.

    ids_ref : VMEM (T, 1) int32  -- token ids for this tile
    emb_ref : VMEM (V, D)        -- whole table, resident (single copy)
    out_ref : VMEM (T, D)        -- output tile (single lane-dense store)
    """
    T = out_ref.shape[0]
    ids = ids_ref[...]                                           # (T, 1)
    iota = lax.broadcasted_iota(jnp.int32, (T, vocab_size), 1)   # (T, V)
    one_hot = (ids == iota).astype(emb_ref.dtype)
    # precision=HIGHEST => exact row selection even for an f32 table (0/1 is
    # exact in every pass of the bf16 decomposition).  For a bf16 table this
    # is the native single-pass matmul.
    out_ref[...] = jnp.dot(
        one_hot, emb_ref[...],
        preferred_element_type=jnp.float32,
        precision=lax.Precision.HIGHEST,
    ).astype(out_ref.dtype)


def _embedding_gather_kernel(ids_ref, emb_ref, out_ref, *,
                             tokens_per_tile, rows_per_store):
    """Moderate-vocab path: direct row gather from the resident VMEM table.

    ids_ref : SMEM (padded,) int32  -- all token ids (scalar-prefetched)
    emb_ref : VMEM (V, D)           -- whole table, resident (single copy)
    out_ref : VMEM (T, D)           -- output tile
    """
    base = pl.program_id(0) * tokens_per_tile
    n_groups = tokens_per_tile // rows_per_store

    @pl.loop(0, n_groups)
    def _(g):
        off = pl.multiple_of(g * rows_per_store, rows_per_store)
        rows = [emb_ref[pl.ds(ids_ref[base + off + r], 1), :]
                for r in range(rows_per_store)]
        out_ref[pl.ds(off, rows_per_store), :] = jnp.concatenate(rows, axis=0)


# ---------------------------------------------------------------------------
# Wrapper
# ---------------------------------------------------------------------------

def embedding_forward(x, emb_table, *, tokens_per_tile_max=256):
    """x: integer array (any shape); emb_table: (V, D) -> x.shape + (D,)."""
    V, D = emb_table.shape
    itemsize = jnp.dtype(emb_table.dtype).itemsize
    out_shape = tuple(x.shape) + (D,)

    num_tokens = int(x.size)
    # Adaptive tile: a single right-sized tile for small inputs (no wasted
    # work, no post-kernel slice); capped at tokens_per_tile_max so the
    # per-grid-step overhead is amortized for large inputs.
    T = min(_round_up(tokens_per_tile_max, _ROWS_PER_STORE),
            _round_up(max(num_tokens, _ROWS_PER_STORE), _ROWS_PER_STORE))
    num_tiles = pl.cdiv(num_tokens, T)
    padded = num_tiles * T

    # --- per-generation VMEM budget: count the whole working set ------------
    vmem_cap = _vmem_capacity_bytes()
    budget = int(vmem_cap * 0.4)                  # headroom for compiler scratch
    table_bytes = V * D * itemsize                # single resident copy
    out_bytes = 2 * T * D * itemsize              # double-buffered output tiles
    ids_bytes = 2 * T * 4                         # (one-hot path) ids tiles
    onehot_bytes = T * V * itemsize + T * D * 4   # (T, V) temp + f32 accumulator
    gather_ws = table_bytes + out_bytes
    onehot_ws = table_bytes + out_bytes + ids_bytes + onehot_bytes

    if gather_ws > budget:
        # TODO(synk): HBM-resident table (memory_space=pl.ANY) with a
        # double-buffered per-row make_async_copy gather for very large V*D.
        raise NotImplementedError(
            f"embedding table ({table_bytes} B) exceeds the VMEM-resident "
            f"budget ({budget} B); HBM DMA-gather path not implemented")

    use_onehot = (V <= _ONE_HOT_MAX_VOCAB) and (onehot_ws <= budget)
    working_set = onehot_ws if use_onehot else gather_ws
    vmem_limit = int(min(vmem_cap, max(2 * working_set, 16 * 1024 * 1024)))

    ids = x.reshape(num_tokens).astype(jnp.int32)
    if padded != num_tokens:
        # Pad with index 0 (always valid); padded rows are sliced off below.
        ids = jnp.pad(ids, (0, padded - num_tokens))

    compiler_params = pltpu.CompilerParams(
        dimension_semantics=("parallel",),        # independent output tiles
        vmem_limit_bytes=vmem_limit,
    )
    # Whole-array VMEM operand: one resident copy, not pipelined/double-buffered.
    table_spec = pl.BlockSpec(memory_space=pltpu.MemorySpace.VMEM)

    if use_onehot:
        kernel = functools.partial(_embedding_onehot_kernel, vocab_size=V)
        out_flat = pl.pallas_call(
            kernel,
            out_shape=jax.ShapeDtypeStruct((padded, D), emb_table.dtype),
            grid_spec=pltpu.PrefetchScalarGridSpec(
                num_scalar_prefetch=0,
                grid=(num_tiles,),
                in_specs=[
                    pl.BlockSpec((T, 1), lambda i: (i, 0)),   # per-tile ids
                    table_spec,                               # resident table
                ],
                out_specs=pl.BlockSpec((T, D), lambda i: (i, 0)),
            ),
            compiler_params=compiler_params,
        )(ids.reshape(padded, 1), emb_table)
    else:
        kernel = functools.partial(
            _embedding_gather_kernel,
            tokens_per_tile=T, rows_per_store=_ROWS_PER_STORE)
        out_flat = pl.pallas_call(
            kernel,
            out_shape=jax.ShapeDtypeStruct((padded, D), emb_table.dtype),
            grid_spec=pltpu.PrefetchScalarGridSpec(
                num_scalar_prefetch=1,             # ids land in SMEM
                grid=(num_tiles,),
                in_specs=[table_spec],             # resident table
                out_specs=pl.BlockSpec((T, D), lambda i, ids_sm: (i, 0)),
            ),
            compiler_params=compiler_params,
        )(ids, emb_table)

    if padded != num_tokens:
        # Only the ragged case pays this extra slice pass; tile selection above
        # avoids padding whenever num_tokens is a multiple of 8.
        out_flat = out_flat[:num_tokens]
    return out_flat.reshape(out_shape)


if __name__ == "__main__":
    # Small, deterministic problem consistent with nn.Embedding(vocab, dim).
    vocab_size = 64
    embedding_dim = 128
    B, S = 2, 16

    key = jax.random.PRNGKey(0)
    k_emb, k_idx, k_idx2, k_emb2, k_idx3 = jax.random.split(key, 5)

    # nn.Embedding default init: weight ~ N(0, 1)
    emb_table = jax.random.normal(k_emb, (vocab_size, embedding_dim),
                                  dtype=jnp.float32)
    x = jax.random.randint(k_idx, (B, S), 0, vocab_size, dtype=jnp.int32)

    out = jax.block_until_ready(embedding_forward(x, emb_table))
    ref = emb_table[x]
    assert out.shape == (B, S, embedding_dim)
    assert jnp.allclose(out, ref), "mismatch vs reference gather (one-hot path)"

    # Ragged / padding path (num_tokens not a multiple of the tile size).
    x2 = jax.random.randint(k_idx2, (3, 5), 0, vocab_size, dtype=jnp.int32)
    out2 = jax.block_until_ready(embedding_forward(x2, emb_table))
    assert jnp.allclose(out2, emb_table[x2]), "mismatch on ragged shape"

    # Moderate-vocab path: exercises the SMEM-ids direct row-gather kernel.
    V2, D2 = 2048, 128
    emb2 = jax.random.normal(k_emb2, (V2, D2), dtype=jnp.float32)
    x3 = jax.random.randint(k_idx3, (2, 32), 0, V2, dtype=jnp.int32)
    out3 = jax.block_until_ready(embedding_forward(x3, emb2))
    assert jnp.allclose(out3, emb2[x3]), "mismatch vs reference (gather path)"

    print("KERNEL_OK")
</pallas_src>

<mosaic_0001>
module attributes {stable_mosaic.version = 11 : i64} {
  func.func @_embedding_onehot_kernel(%arg0: i32, %arg1: memref<32x1xi32, #tpu.memory_space<vmem>>, %arg2: memref<64x128xf32, #tpu.memory_space<vmem>>, %arg3: memref<32x128xf32, #tpu.memory_space<vmem>>) attributes {dimension_semantics = [#tpu.dimension_semantics<parallel>], iteration_bounds = array<i64: 1>, scalar_prefetch = 0 : i64, scratch_operands = 0 : i64, tpu.core_type = #tpu.core_type<tc>, window_params = [{transform_indices = @transform_0, window_bounds = array<i64: 32, 1>}, {pipeline_mode = #tpu.pipeline_mode<synchronous>, transform_indices = @transform_1, window_bounds = array<i64: 64, 128>}, {transform_indices = @transform_2, window_bounds = array<i64: 32, 128>}]} {
    %c0 = arith.constant 0 : index
    %c0_0 = arith.constant 0 : index
    %0 = vector.load %arg1[%c0, %c0_0] : memref<32x1xi32, #tpu.memory_space<vmem>>, vector<32x1xi32>
    %1 = tpu.iota {dimensions = array<i32: 1>} : vector<32x64xi32>
    %2 = vector.broadcast %0 : vector<32x1xi32> to vector<32x64xi32>
    %3 = arith.cmpi eq, %2, %1 : vector<32x64xi32>
    %4 = arith.extui %3 : vector<32x64xi1> to vector<32x64xi32>
    %5 = arith.sitofp %4 : vector<32x64xi32> to vector<32x64xf32>
    %c0_1 = arith.constant 0 : index
    %c0_2 = arith.constant 0 : index
    %6 = vector.load %arg2[%c0_1, %c0_2] : memref<64x128xf32, #tpu.memory_space<vmem>>, vector<64x128xf32>
    %cst = arith.constant dense<0.000000e+00> : vector<32x128xf32>
    %7 = tpu.matmul %5, %6, %cst {dimension_numbers = #tpu.dot_dimension_numbers<[1], [0], [0], [1], [0, 0, 1, 1], [], []>, precision = #tpu.contract_precision<fp32>} : vector<32x64xf32>, vector<64x128xf32>, vector<32x128xf32> -> vector<32x128xf32>
    %c0_3 = arith.constant 0 : index
    %c0_4 = arith.constant 0 : index
    %8 = vector.load %arg3[%c0_3, %c0_4] : memref<32x128xf32, #tpu.memory_space<vmem>>, vector<32x128xf32>
    tpu.vector_store %arg3[%c0_3, %c0_4], %7 {strides = array<i32>} : memref<32x128xf32, #tpu.memory_space<vmem>>, vector<32x128xf32>,
    return
  }
  func.func @transform_0(%arg0: i32) -> (i32, i32) {
    %c0_i32 = arith.constant 0 : i32
    %c0_i32_0 = arith.constant 0 : i32
    return %arg0, %c0_i32 : i32, i32
  }
  func.func @transform_1(%arg0: i32) -> (i32, i32) {
    %c0_i32 = arith.constant 0 : i32
    %c0_i32_0 = arith.constant 0 : i32
    %c0_i32_1 = arith.constant 0 : i32
    return %c0_i32, %c0_i32_0 : i32, i32
  }
  func.func @transform_2(%arg0: i32) -> (i32, i32) {
    %c0_i32 = arith.constant 0 : i32
    %c0_i32_0 = arith.constant 0 : i32
    return %arg0, %c0_i32 : i32, i32
  }
}

</mosaic_0001>

<llo_original>
// kernel: tpu_custom_call.1
$region0: #{tpu_custom_call.1}
  #allocation0 [shape = 'u32[]', space=smem, size = 0x4, offset = 0x4, fixed_abs, tag = 'smem constant byte address 0x4 - core index']
  #allocation1 [shape = 'u32[144,128]{1,0:T(1,128)}', space=vmem, size = 0x12000, scoped, tag = 'internal scratch']
  %s0 = inlined_call_operand.vmem [shape: s32[32,1], index: 0, kind: input, shape index: {}]
  %s1 = inlined_call_operand.hbm [shape: f32[64,128], index: 1, kind: input, shape index: {}]
  %s2 = inlined_call_operand.hbm [shape: f32[32,128], index: 2, kind: output, shape index: {}]
  %s3 = sld [smem:[#allocation0]]
  $region22: #{tpu_custom_call.1} parent=0
    _
  %s5 = ssub.s32 1, %s3
  %s6 = scalar_select 0, %s5, %s3
  $region1: #{tpu_custom_call.1} parent=0
    #allocation2 [shape = 'u8[32768]{0}', space=vmem, size = 0x8000, scoped, tag = 'input window, operand 1, single buffered']
    #allocation3 [shape = 's32[1]{0}', space=sflag, size = 0x4, scoped, tag = 'scoped memory for tpu_custom_call.1']
    #allocation4 [shape = 's32[1]{0}', space=sflag, size = 0x4, scoped, tag = 'scoped memory for tpu_custom_call.1']
    #allocation5 [shape = 'u8[16384]{0}', space=vmem, size = 0x4000, scoped, tag = 'output window, operand 0, single buffered']
    %7 = vsyncpa [#allocation3], 0
    %8 = vsyncpa [#allocation4], 0
    // Predicated region
    $region2: #{tpu_custom_call.1} parent=1 // pred_check
      _
    $region3: #{tpu_custom_call.1} parent=1 // pred_check_branch
      %10 = sbr.rel (0) target = $region5
    $region4: #{tpu_custom_call.1} parent=1 // pred_region
      _
    $region5: #{tpu_custom_call.1} parent=1 // pred_fallthru
      _
    // Predicated region
    $region6: #{tpu_custom_call.1} parent=1 // pred_check
      _
    $region7: #{tpu_custom_call.1} parent=1 // pred_check_branch
      %12 = sbr.rel (0) target = $region9
    $region8: #{tpu_custom_call.1} parent=1 // pred_region
      %s14 = ssub.s32 1024, 1024
      %15 = vsyncadd [#allocation3], %s14
      %s16 = sshll.u32 [#allocation2], 4
      %s17 = int_to_ptr.vmem [resolvable:$true] %s16
      %22 = dma.hbm_to_vmem [thread:$0]  %s1, 1024, %s17, [#allocation3], 128, 128, 8
    $region9: #{tpu_custom_call.1} parent=1 // pred_fallthru
      _
    // Predicated region
    $region10: #{tpu_custom_call.1} parent=1 // pred_check
      _
    $region11: #{tpu_custom_call.1} parent=1 // pred_check_branch
      %24 = sbr.rel (0) target = $region13
    $region12: #{tpu_custom_call.1} parent=1 // pred_region
      %25 = dma.done [#allocation3], 1024
    $region13: #{tpu_custom_call.1} parent=1 // pred_fallthru
      _
    %v26 = vld [vmem:[%s0] sm:$0xff]
    %v27 = vld [vmem:[%s0 + $0x8] sm:$0xff]
    %v28 = vld [vmem:[%s0 + $0x10] sm:$0xff]
    %v29 = vld [vmem:[%s0 + $0x18] sm:$0xff]
    %v30 = vlaneseq
    %v31 = vand.u32 %v30, 127
    %32 = vset.pattern.permute.xlu0 0
    %33 = vperm.xlu0 %32, %v26
    %v34 = vpop.permute.xlu0 %33
    %35 = vset.pattern.permute.xlu0 0
    %36 = vperm.xlu0 %35, %v27
    %v37 = vpop.permute.xlu0 %36
    %38 = vset.pattern.permute.xlu0 0
    %39 = vperm.xlu0 %38, %v28
    %v40 = vpop.permute.xlu0 %39
    %41 = vset.pattern.permute.xlu0 0
    %42 = vperm.xlu0 %41, %v29
    %v43 = vpop.permute.xlu0 %42
    %vm44 = vcmp.eq.s32.totalorder %v34, %v31
    %vm45 = vcmp.eq.s32.totalorder %v37, %v31
    %vm46 = vcmp.eq.s32.totalorder %v40, %v31
    %vm47 = vcmp.eq.s32.totalorder %v43, %v31
    %v48 = vsel %vm44, 1, 0
    %v49 = vsel %vm45, 1, 0
    %v50 = vsel %vm46, 1, 0
    %v51 = vsel %vm47, 1, 0
    %v52 = vcvt.s32.f32 %v48
    %v53 = vcvt.s32.f32 %v49
    %v54 = vcvt.s32.f32 %v50
    %v55 = vcvt.s32.f32 %v51
    %v56 = vld [vmem:[#allocation2] sm:$0xff]
    %v57 = vld [vmem:[#allocation2 + $0x8] sm:$0xff]
    %v58 = vld [vmem:[#allocation2 + $0x10] sm:$0xff]
    %v59 = vld [vmem:[#allocation2 + $0x18] sm:$0xff]
    %v60 = vld [vmem:[#allocation2 + $0x20] sm:$0xff]
    %v61 = vld [vmem:[#allocation2 + $0x28] sm:$0xff]
    %v62 = vld [vmem:[#allocation2 + $0x30] sm:$0xff]
    %v63 = vld [vmem:[#allocation2 + $0x38] sm:$0xff]
    %vm64 = vcmask 523264
    %v66 = vsel %vm64, %v52, 0
    %v69 = vsel %vm64, %v53, 0
    %v72 = vsel %vm64, %v54, 0
    %v75 = vsel %vm64, %v55, 0
    %77 = vmatprep.subr.mxu0 0.0
    %78 = vmatpush1.msra.mxu0 0.0
    %79 = vmatprep.subr.mxu0 0.0
    %80 = vmatpush1.msra.mxu0 0.0
    %81 = vmatprep.subr.mxu0 0.0
    %82 = vmatpush1.msra.mxu0 0.0
    %83 = vmatprep.subr.mxu0 0.0
    %84 = vmatpush1.msra.mxu0 0.0
    %85 = vmatprep.subr.mxu0 0.0
    %86 = vmatpush1.msra.mxu0 0.0
    %87 = vmatprep.subr.mxu0 0.0
    %88 = vmatpush1.msra.mxu0 0.0
    %89 = vmatprep.subr.mxu0 0.0
    %90 = vmatpush1.msra.mxu0 0.0
    %91 = vmatprep.subr.mxu0 0.0
    %92 = vmatpush1.msra.mxu0 0.0
    %93 = vmatprep.subr.mxu0 0.0
    %v94 = vand.u32 %v63, 4294901760
    %95 = vmatpush1.msra.mxu0 %v94
    %96 = vmatprep.subr.mxu0 0.0
    %v97 = vand.u32 %v62, 4294901760
    %98 = vmatpush1.msra.mxu0 %v97
    %99 = vmatprep.subr.mxu0 0.0
    %v100 = vand.u32 %v61, 4294901760
    %101 = vmatpush1.msra.mxu0 %v100
    %102 = vmatprep.subr.mxu0 0.0
    %v103 = vand.u32 %v60, 4294901760
    %104 = vmatpush1.msra.mxu0 %v103
    %105 = vmatprep.subr.mxu0 0.0
    %v106 = vand.u32 %v59, 4294901760
    %107 = vmatpush1.msra.mxu0 %v106
    %108 = vmatprep.subr.mxu0 0.0
    %v109 = vand.u32 %v58, 4294901760
    %110 = vmatpush1.msra.mxu0 %v109
    %111 = vmatprep.subr.mxu0 0.0
    %v112 = vand.u32 %v57, 4294901760
    %113 = vmatpush1.msra.mxu0 %v112
    %114 = vmatprep.subr.mxu0 0.0
    %v115 = vand.u32 %v56, 4294901760
    %116 = vmatpush1.msra.mxu0 %v115
    %117 = vmatprep.subr.mxu0 0.0
    %118 = vmatpush2.msra.mxu0 0.0
    %119 = vmatprep.subr.mxu0 0.0
    %120 = vmatpush2.msra.mxu0 0.0
    %121 = vmatprep.subr.mxu0 0.0
    %122 = vmatpush2.msra.mxu0 0.0
    %123 = vmatprep.subr.mxu0 0.0
    %124 = vmatpush2.msra.mxu0 0.0
    %125 = vmatprep.subr.mxu0 0.0
    %126 = vmatpush2.msra.mxu0 0.0
    %127 = vmatprep.subr.mxu0 0.0
    %128 = vmatpush2.msra.mxu0 0.0
    %129 = vmatprep.subr.mxu0 0.0
    %130 = vmatpush2.msra.mxu0 0.0
    %131 = vmatprep.subr.mxu0 0.0
    %132 = vmatpush2.msra.mxu0 0.0
    %133 = vmatprep.subr.mxu0 0.0
    %134 = vmatpush2.msra.mxu0 0.0
    %135 = vmatprep.subr.mxu0 0.0
    %136 = vmatpush2.msra.mxu0 0.0
    %137 = vmatprep.subr.mxu0 0.0
    %138 = vmatpush2.msra.mxu0 0.0
    %139 = vmatprep.subr.mxu0 0.0
    %140 = vmatpush2.msra.mxu0 0.0
    %141 = vmatprep.subr.mxu0 0.0
    %142 = vmatpush2.msra.mxu0 0.0
    %143 = vmatprep.subr.mxu0 0.0
    %144 = vmatpush2.msra.mxu0 0.0
    %145 = vmatprep.subr.mxu0 0.0
    %146 = vmatpush2.msra.mxu0 0.0
    %147 = vmatprep.subr.mxu0 0.0
    %148 = vmatpush2.msra.mxu0 0.0
    %149 = vmatprep.mubr.f32.mxu0 0.0
    %v150 = vand.u32 %v66, 4294901760
    %v151 = vsub.f32 %v66, %v150
    %v152 = vand.u32 %v151, 4294901760
    %v153 = vsub.f32 %v151, %v152
    %v154 = vand.u32 %v153, 4294901760
    %155 = vmatmul.mubr.f32.gmra.mxu0 %v154
    %v156 = vpop.f32.mrf.mxu0
    %v157 = vadd.f32 0.0, %v156
    %v158 = vpop.f32.mrf.mxu0
    %159 = vmatprep.mubr.f32.mxu0 0.0
    %v160 = vand.u32 %v69, 4294901760
    %v161 = vsub.f32 %v69, %v160
    %v162 = vand.u32 %v161, 4294901760
    %v163 = vsub.f32 %v161, %v162
    %v164 = vand.u32 %v163, 4294901760
    %165 = vmatmul.mubr.f32.gmra.mxu0 %v164
    %v166 = vpop.f32.mrf.mxu0
    %v167 = vadd.f32 0.0, %v166
    %v168 = vpop.f32.mrf.mxu0
    %169 = vmatprep.mubr.f32.mxu0 0.0
    %v170 = vand.u32 %v72, 4294901760
    %v171 = vsub.f32 %v72, %v170
    %v172 = vand.u32 %v171, 4294901760
    %v173 = vsub.f32 %v171, %v172
    %v174 = vand.u32 %v173, 4294901760
    %175 = vmatmul.mubr.f32.gmra.mxu0 %v174
    %v176 = vpop.f32.mrf.mxu0
    %v177 = vadd.f32 0.0, %v176
    %v178 = vpop.f32.mrf.mxu0
    %179 = vmatprep.mubr.f32.mxu0 0.0
    %v180 = vand.u32 %v75, 4294901760
    %v181 = vsub.f32 %v75, %v180
    %v182 = vand.u32 %v181, 4294901760
    %v183 = vsub.f32 %v181, %v182
    %v184 = vand.u32 %v183, 4294901760
    %185 = vmatmul.mubr.f32.gmra.mxu0 %v184
    %v186 = vpop.f32.mrf.mxu0
    %v187 = vadd.f32 0.0, %v186
    %v188 = vpop.f32.mrf.mxu0
    %189 = vdwg.mxu0
    %190 = vmatprep.subr.mxu0 0.0
    %191 = vmatpush1.msra.mxu0 0.0
    %192 = vmatprep.subr.mxu0 0.0
    %193 = vmatpush1.msra.mxu0 0.0
    %194 = vmatprep.subr.mxu0 0.0
    %195 = vmatpush1.msra.mxu0 0.0
    %196 = vmatprep.subr.mxu0 0.0
    %197 = vmatpush1.msra.mxu0 0.0
    %198 = vmatprep.subr.mxu0 0.0
    %199 = vmatpush1.msra.mxu0 0.0
    %200 = vmatprep.subr.mxu0 0.0
    %201 = vmatpush1.msra.mxu0 0.0
    %202 = vmatprep.subr.mxu0 0.0
    %203 = vmatpush1.msra.mxu0 0.0
    %204 = vmatprep.subr.mxu0 0.0
    %205 = vmatpush1.msra.mxu0 0.0
    %206 = vmatprep.subr.mxu0 0.0
    %v207 = vand.u32 %v63, 4294901760
    %v208 = vsub.f32 %v63, %v207
    %v209 = vand.u32 %v208, 4294901760
    %v210 = vsub.f32 %v208, %v209
    %v211 = vand.u32 %v210, 4294901760
    %212 = vmatpush1.msra.mxu0 %v211
    %213 = vmatprep.subr.mxu0 0.0
    %v214 = vand.u32 %v62, 4294901760
    %v215 = vsub.f32 %v62, %v214
    %v216 = vand.u32 %v215, 4294901760
    %v217 = vsub.f32 %v215, %v216
    %v218 = vand.u32 %v217, 4294901760
    %219 = vmatpush1.msra.mxu0 %v218
    %220 = vmatprep.subr.mxu0 0.0
    %v221 = vand.u32 %v61, 4294901760
    %v222 = vsub.f32 %v61, %v221
    %v223 = vand.u32 %v222, 4294901760
    %v224 = vsub.f32 %v222, %v223
    %v225 = vand.u32 %v224, 4294901760
    %226 = vmatpush1.msra.mxu0 %v225
    %227 = vmatprep.subr.mxu0 0.0
    %v228 = vand.u32 %v60, 4294901760
    %v229 = vsub.f32 %v60, %v228
    %v230 = vand.u32 %v229, 4294901760
    %v231 = vsub.f32 %v229, %v230
    %v232 = vand.u32 %v231, 4294901760
    %233 = vmatpush1.msra.mxu0 %v232
    %234 = vmatprep.subr.mxu0 0.0
    %v235 = vand.u32 %v59, 4294901760
    %v236 = vsub.f32 %v59, %v235
    %v237 = vand.u32 %v236, 4294901760
    %v238 = vsub.f32 %v236, %v237
    %v239 = vand.u32 %v238, 4294901760
    %240 = vmatpush1.msra.mxu0 %v239
    %241 = vmatprep.subr.mxu0 0.0
    %v242 = vand.u32 %v58, 4294901760
    %v243 = vsub.f32 %v58, %v242
    %v244 = vand.u32 %v243, 4294901760
    %v245 = vsub.f32 %v243, %v244
    %v246 = vand.u32 %v245, 4294901760
    %247 = vmatpush1.msra.mxu0 %v246
    %248 = vmatprep.subr.mxu0 0.0
    %v249 = vand.u32 %v57, 4294901760
    %v250 = vsub.f32 %v57, %v249
    %v251 = vand.u32 %v250, 4294901760
    %v252 = vsub.f32 %v250, %v251
    %v253 = vand.u32 %v252, 4294901760
    %254 = vmatpush1.msra.mxu0 %v253
    %255 = vmatprep.subr.mxu0 0.0
    %v256 = vand.u32 %v56, 4294901760
    %v257 = vsub.f32 %v56, %v256
    %v258 = vand.u32 %v257, 4294901760
    %v259 = vsub.f32 %v257, %v258
    %v260 = vand.u32 %v259, 4294901760
    %261 = vmatpush1.msra.mxu0 %v260
    %262 = vmatprep.subr.mxu0 0.0
    %263 = vmatpush2.msra.mxu0 0.0
    %264 = vmatprep.subr.mxu0 0.0
    %265 = vmatpush2.msra.mxu0 0.0
    %266 = vmatprep.subr.mxu0 0.0
    %267 = vmatpush2.msra.mxu0 0.0
    %268 = vmatprep.subr.mxu0 0.0
    %269 = vmatpush2.msra.mxu0 0.0
    %270 = vmatprep.subr.mxu0 0.0
    %271 = vmatpush2.msra.mxu0 0.0
    %272 = vmatprep.subr.mxu0 0.0
    %273 = vmatpush2.msra.mxu0 0.0
    %274 = vmatprep.subr.mxu0 0.0
    %275 = vmatpush2.msra.mxu0 0.0
    %276 = vmatprep.subr.mxu0 0.0
    %277 = vmatpush2.msra.mxu0 0.0
    %278 = vmatprep.subr.mxu0 0.0
    %279 = vmatpush2.msra.mxu0 0.0
    %280 = vmatprep.subr.mxu0 0.0
    %281 = vmatpush2.msra.mxu0 0.0
    %282 = vmatprep.subr.mxu0 0.0
    %283 = vmatpush2.msra.mxu0 0.0
    %284 = vmatprep.subr.mxu0 0.0
    %285 = vmatpush2.msra.mxu0 0.0
    %286 = vmatprep.subr.mxu0 0.0
    %287 = vmatpush2.msra.mxu0 0.0
    %288 = vmatprep.subr.mxu0 0.0
    %289 = vmatpush2.msra.mxu0 0.0
    %290 = vmatprep.subr.mxu0 0.0
    %291 = vmatpush2.msra.mxu0 0.0
    %292 = vmatprep.subr.mxu0 0.0
    %293 = vmatpush2.msra.mxu0 0.0
    %294 = vmatprep.mubr.f32.mxu0 0.0
    %v295 = vand.u32 %v66, 4294901760
    %296 = vmatmul.mubr.f32.gmra.mxu0 %v295
    %v297 = vpop.f32.mrf.mxu0
    %v298 = vadd.f32 %v157, %v297
    %v299 = vpop.f32.mrf.mxu0
    %300 = vmatprep.mubr.f32.mxu0 0.0
    %v301 = vand.u32 %v69, 4294901760
    %302 = vmatmul.mubr.f32.gmra.mxu0 %v301
    %v303 = vpop.f32.mrf.mxu0
    %v304 = vadd.f32 %v167, %v303
    %v305 = vpop.f32.mrf.mxu0
    %306 = vmatprep.mubr.f32.mxu0 0.0
    %v307 = vand.u32 %v72, 4294901760
    %308 = vmatmul.mubr.f32.gmra.mxu0 %v307
    %v309 = vpop.f32.mrf.mxu0
    %v310 = vadd.f32 %v177, %v309
    %v311 = vpop.f32.mrf.mxu0
    %312 = vmatprep.mubr.f32.mxu0 0.0
    %v313 = vand.u32 %v75, 4294901760
    %314 = vmatmul.mubr.f32.gmra.mxu0 %v313
    %v315 = vpop.f32.mrf.mxu0
    %v316 = vadd.f32 %v187, %v315
    %v317 = vpop.f32.mrf.mxu0
    %318 = vdwg.mxu0
    %319 = vmatprep.subr.mxu0 0.0
    %320 = vmatpush1.msra.mxu0 0.0
    %321 = vmatprep.subr.mxu0 0.0
    %322 = vmatpush1.msra.mxu0 0.0
    %323 = vmatprep.subr.mxu0 0.0
    %324 = vmatpush1.msra.mxu0 0.0
    %325 = vmatprep.subr.mxu0 0.0
    %326 = vmatpush1.msra.mxu0 0.0
    %327 = vmatprep.subr.mxu0 0.0
    %328 = vmatpush1.msra.mxu0 0.0
    %329 = vmatprep.subr.mxu0 0.0
    %330 = vmatpush1.msra.mxu0 0.0
    %331 = vmatprep.subr.mxu0 0.0
    %332 = vmatpush1.msra.mxu0 0.0
    %333 = vmatprep.subr.mxu0 0.0
    %334 = vmatpush1.msra.mxu0 0.0
    %335 = vmatprep.subr.mxu0 0.0
    %v336 = vand.u32 %v63, 4294901760
    %v337 = vsub.f32 %v63, %v336
    %338 = vmatpush1.msra.mxu0 %v337
    %339 = vmatprep.subr.mxu0 0.0
    %v340 = vand.u32 %v62, 4294901760
    %v341 = vsub.f32 %v62, %v340
    %342 = vmatpush1.msra.mxu0 %v341
    %343 = vmatprep.subr.mxu0 0.0
    %v344 = vand.u32 %v61, 4294901760
    %v345 = vsub.f32 %v61, %v344
    %346 = vmatpush1.msra.mxu0 %v345
    %347 = vmatprep.subr.mxu0 0.0
    %v348 = vand.u32 %v60, 4294901760
    %v349 = vsub.f32 %v60, %v348
    %350 = vmatpush1.msra.mxu0 %v349
    %351 = vmatprep.subr.mxu0 0.0
    %v352 = vand.u32 %v59, 4294901760
    %v353 = vsub.f32 %v59, %v352
    %354 = vmatpush1.msra.mxu0 %v353
    %355 = vmatprep.subr.mxu0 0.0
    %v356 = vand.u32 %v58, 4294901760
    %v357 = vsub.f32 %v58, %v356
    %358 = vmatpush1.msra.mxu0 %v357
    %359 = vmatprep.subr.mxu0 0.0
    %v360 = vand.u32 %v57, 4294901760
    %v361 = vsub.f32 %v57, %v360
    %362 = vmatpush1.msra.mxu0 %v361
    %363 = vmatprep.subr.mxu0 0.0
    %v364 = vand.u32 %v56, 4294901760
    %v365 = vsub.f32 %v56, %v364
    %366 = vmatpush1.msra.mxu0 %v365
    %367 = vmatprep.subr.mxu0 0.0
    %368 = vmatpush2.msra.mxu0 0.0
    %369 = vmatprep.subr.mxu0 0.0
    %370 = vmatpush2.msra.mxu0 0.0
    %371 = vmatprep.subr.mxu0 0.0
    %372 = vmatpush2.msra.mxu0 0.0
    %373 = vmatprep.subr.mxu0 0.0
    %374 = vmatpush2.msra.mxu0 0.0
    %375 = vmatprep.subr.mxu0 0.0
    %376 = vmatpush2.msra.mxu0 0.0
    %377 = vmatprep.subr.mxu0 0.0
    %378 = vmatpush2.msra.mxu0 0.0
    %379 = vmatprep.subr.mxu0 0.0
    %380 = vmatpush2.msra.mxu0 0.0
    %381 = vmatprep.subr.mxu0 0.0
    %382 = vmatpush2.msra.mxu0 0.0
    %383 = vmatprep.subr.mxu0 0.0
    %384 = vmatpush2.msra.mxu0 0.0
    %385 = vmatprep.subr.mxu0 0.0
    %386 = vmatpush2.msra.mxu0 0.0
    %387 = vmatprep.subr.mxu0 0.0
    %388 = vmatpush2.msra.mxu0 0.0
    %389 = vmatprep.subr.mxu0 0.0
    %390 = vmatpush2.msra.mxu0 0.0
    %391 = vmatprep.subr.mxu0 0.0
    %392 = vmatpush2.msra.mxu0 0.0
    %393 = vmatprep.subr.mxu0 0.0
    %394 = vmatpush2.msra.mxu0 0.0
    %395 = vmatprep.subr.mxu0 0.0
    %396 = vmatpush2.msra.mxu0 0.0
    %397 = vmatprep.subr.mxu0 0.0
    %398 = vmatpush2.msra.mxu0 0.0
    %399 = vmatprep.mubr.f32.mxu0 0.0
    %v400 = vand.u32 %v66, 4294901760
    %v401 = vsub.f32 %v66, %v400
    %402 = vmatmul.mubr.f32.gmra.mxu0 %v401
    %v403 = vpop.f32.mrf.mxu0
    %v404 = vadd.f32 %v298, %v403
    %v405 = vpop.f32.mrf.mxu0
    %406 = vmatprep.mubr.f32.mxu0 0.0
    %v407 = vand.u32 %v69, 4294901760
    %v408 = vsub.f32 %v69, %v407
    %409 = vmatmul.mubr.f32.gmra.mxu0 %v408
    %v410 = vpop.f32.mrf.mxu0
    %v411 = vadd.f32 %v304, %v410
    %v412 = vpop.f32.mrf.mxu0
    %413 = vmatprep.mubr.f32.mxu0 0.0
    %v414 = vand.u32 %v72, 4294901760
    %v415 = vsub.f32 %v72, %v414
    %416 = vmatmul.mubr.f32.gmra.mxu0 %v415
    %v417 = vpop.f32.mrf.mxu0
    %v418 = vadd.f32 %v310, %v417
    %v419 = vpop.f32.mrf.mxu0
    %420 = vmatprep.mubr.f32.mxu0 0.0
    %v421 = vand.u32 %v75, 4294901760
    %v422 = vsub.f32 %v75, %v421
    %423 = vmatmul.mubr.f32.gmra.mxu0 %v422
    %v424 = vpop.f32.mrf.mxu0
    %v425 = vadd.f32 %v316, %v424
    %v426 = vpop.f32.mrf.mxu0
    %427 = vdwg.mxu0
    %428 = vmatprep.subr.mxu0 0.0
    %429 = vmatpush1.msra.mxu0 0.0
    %430 = vmatprep.subr.mxu0 0.0
    %431 = vmatpush1.msra.mxu0 0.0
    %432 = vmatprep.subr.mxu0 0.0
    %433 = vmatpush1.msra.mxu0 0.0
    %434 = vmatprep.subr.mxu0 0.0
    %435 = vmatpush1.msra.mxu0 0.0
    %436 = vmatprep.subr.mxu0 0.0
    %437 = vmatpush1.msra.mxu0 0.0
    %438 = vmatprep.subr.mxu0 0.0
    %439 = vmatpush1.msra.mxu0 0.0
    %440 = vmatprep.subr.mxu0 0.0
    %441 = vmatpush1.msra.mxu0 0.0
    %442 = vmatprep.subr.mxu0 0.0
    %443 = vmatpush1.msra.mxu0 0.0
    %444 = vmatprep.subr.mxu0 0.0
    %v445 = vand.u32 %v63, 4294901760
    %446 = vmatpush1.msra.mxu0 %v445
    %447 = vmatprep.subr.mxu0 0.0
    %v448 = vand.u32 %v62, 4294901760
    %449 = vmatpush1.msra.mxu0 %v448
    %450 = vmatprep.subr.mxu0 0.0
    %v451 = vand.u32 %v61, 4294901760
    %452 = vmatpush1.msra.mxu0 %v451
    %453 = vmatprep.subr.mxu0 0.0
    %v454 = vand.u32 %v60, 4294901760
    %455 = vmatpush1.msra.mxu0 %v454
    %456 = vmatprep.subr.mxu0 0.0
    %v457 = vand.u32 %v59, 4294901760
    %458 = vmatpush1.msra.mxu0 %v457
    %459 = vmatprep.subr.mxu0 0.0
    %v460 = vand.u32 %v58, 4294901760
    %461 = vmatpush1.msra.mxu0 %v460
    %462 = vmatprep.subr.mxu0 0.0
    %v463 = vand.u32 %v57, 4294901760
    %464 = vmatpush1.msra.mxu0 %v463
    %465 = vmatprep.subr.mxu0 0.0
    %v466 = vand.u32 %v56, 4294901760
    %467 = vmatpush1.msra.mxu0 %v466
    %468 = vmatprep.subr.mxu0 0.0
    %469 = vmatpush2.msra.mxu0 0.0
    %470 = vmatprep.subr.mxu0 0.0
    %471 = vmatpush2.msra.mxu0 0.0
    %472 = vmatprep.subr.mxu0 0.0
    %473 = vmatpush2.msra.mxu0 0.0
    %474 = vmatprep.subr.mxu0 0.0
    %475 = vmatpush2.msra.mxu0 0.0
    %476 = vmatprep.subr.mxu0 0.0
    %477 = vmatpush2.msra.mxu0 0.0
    %478 = vmatprep.subr.mxu0 0.0
    %479 = vmatpush2.msra.mxu0 0.0
    %480 = vmatprep.subr.mxu0 0.0
    %481 = vmatpush2.msra.mxu0 0.0
    %482 = vmatprep.subr.mxu0 0.0
    %483 = vmatpush2.msra.mxu0 0.0
    %484 = vmatprep.subr.mxu0 0.0
    %485 = vmatpush2.msra.mxu0 0.0
    %486 = vmatprep.subr.mxu0 0.0
    %487 = vmatpush2.msra.mxu0 0.0
    %488 = vmatprep.subr.mxu0 0.0
    %489 = vmatpush2.msra.mxu0 0.0
    %490 = vmatprep.subr.mxu0 0.0
    %491 = vmatpush2.msra.mxu0 0.0
    %492 = vmatprep.subr.mxu0 0.0
    %493 = vmatpush2.msra.mxu0 0.0
    %494 = vmatprep.subr.mxu0 0.0
    %495 = vmatpush2.msra.mxu0 0.0
    %496 = vmatprep.subr.mxu0 0.0
    %497 = vmatpush2.msra.mxu0 0.0
    %498 = vmatprep.subr.mxu0 0.0
    %499 = vmatpush2.msra.mxu0 0.0
    %500 = vmatprep.mubr.f32.mxu0 0.0
    %v501 = vand.u32 %v66, 4294901760
    %v502 = vsub.f32 %v66, %v501
    %v503 = vand.u32 %v502, 4294901760
    %504 = vmatmul.mubr.f32.gmra.mxu0 %v503
    %v505 = vpop.f32.mrf.mxu0
    %v506 = vadd.f32 %v404, %v505
    %v507 = vpop.f32.mrf.mxu0
    %508 = vmatprep.mubr.f32.mxu0 0.0
    %v509 = vand.u32 %v69, 4294901760
    %v510 = vsub.f32 %v69, %v509
    %v511 = vand.u32 %v510, 4294901760
    %512 = vmatmul.mubr.f32.gmra.mxu0 %v511
    %v513 = vpop.f32.mrf.mxu0
    %v514 = vadd.f32 %v411, %v513
    %v515 = vpop.f32.mrf.mxu0
    %516 = vmatprep.mubr.f32.mxu0 0.0
    %v517 = vand.u32 %v72, 4294901760
    %v518 = vsub.f32 %v72, %v517
    %v519 = vand.u32 %v518, 4294901760
    %520 = vmatmul.mubr.f32.gmra.mxu0 %v519
    %v521 = vpop.f32.mrf.mxu0
    %v522 = vadd.f32 %v418, %v521
    %v523 = vpop.f32.mrf.mxu0
    %524 = vmatprep.mubr.f32.mxu0 0.0
    %v525 = vand.u32 %v75, 4294901760
    %v526 = vsub.f32 %v75, %v525
    %v527 = vand.u32 %v526, 4294901760
    %528 = vmatmul.mubr.f32.gmra.mxu0 %v527
    %v529 = vpop.f32.mrf.mxu0
    %v530 = vadd.f32 %v425, %v529
    %v531 = vpop.f32.mrf.mxu0
    %532 = vdwg.mxu0
    %533 = vmatprep.subr.mxu0 0.0
    %534 = vmatpush1.msra.mxu0 0.0
    %535 = vmatprep.subr.mxu0 0.0
    %536 = vmatpush1.msra.mxu0 0.0
    %537 = vmatprep.subr.mxu0 0.0
    %538 = vmatpush1.msra.mxu0 0.0
    %539 = vmatprep.subr.mxu0 0.0
    %540 = vmatpush1.msra.mxu0 0.0
    %541 = vmatprep.subr.mxu0 0.0
    %542 = vmatpush1.msra.mxu0 0.0
    %543 = vmatprep.subr.mxu0 0.0
    %544 = vmatpush1.msra.mxu0 0.0
    %545 = vmatprep.subr.mxu0 0.0
    %546 = vmatpush1.msra.mxu0 0.0
    %547 = vmatprep.subr.mxu0 0.0
    %548 = vmatpush1.msra.mxu0 0.0
    %549 = vmatprep.subr.mxu0 0.0
    %v550 = vand.u32 %v63, 4294901760
    %v551 = vsub.f32 %v63, %v550
    %v552 = vand.u32 %v551, 4294901760
    %553 = vmatpush1.msra.mxu0 %v552
    %554 = vmatprep.subr.mxu0 0.0
    %v555 = vand.u32 %v62, 4294901760
    %v556 = vsub.f32 %v62, %v555
    %v557 = vand.u32 %v556, 4294901760
    %558 = vmatpush1.msra.mxu0 %v557
    %559 = vmatprep.subr.mxu0 0.0
    %v560 = vand.u32 %v61, 4294901760
    %v561 = vsub.f32 %v61, %v560
    %v562 = vand.u32 %v561, 4294901760
    %563 = vmatpush1.msra.mxu0 %v562
    %564 = vmatprep.subr.mxu0 0.0
    %v565 = vand.u32 %v60, 4294901760
    %v566 = vsub.f32 %v60, %v565
    %v567 = vand.u32 %v566, 4294901760
    %568 = vmatpush1.msra.mxu0 %v567
    %569 = vmatprep.subr.mxu0 0.0
    %v570 = vand.u32 %v59, 4294901760
    %v571 = vsub.f32 %v59, %v570
    %v572 = vand.u32 %v571, 4294901760
    %573 = vmatpush1.msra.mxu0 %v572
    %574 = vmatprep.subr.mxu0 0.0
    %v575 = vand.u32 %v58, 4294901760
    %v576 = vsub.f32 %v58, %v575
    %v577 = vand.u32 %v576, 4294901760
    %578 = vmatpush1.msra.mxu0 %v577
    %579 = vmatprep.subr.mxu0 0.0
    %v580 = vand.u32 %v57, 4294901760
    %v581 = vsub.f32 %v57, %v580
    %v582 = vand.u32 %v581, 4294901760
    %583 = vmatpush1.msra.mxu0 %v582
    %584 = vmatprep.subr.mxu0 0.0
    %v585 = vand.u32 %v56, 4294901760
    %v586 = vsub.f32 %v56, %v585
    %v587 = vand.u32 %v586, 4294901760
    %588 = vmatpush1.msra.mxu0 %v587
    %589 = vmatprep.subr.mxu0 0.0
    %590 = vmatpush2.msra.mxu0 0.0
    %591 = vmatprep.subr.mxu0 0.0
    %592 = vmatpush2.msra.mxu0 0.0
    %593 = vmatprep.subr.mxu0 0.0
    %594 = vmatpush2.msra.mxu0 0.0
    %595 = vmatprep.subr.mxu0 0.0
    %596 = vmatpush2.msra.mxu0 0.0
    %597 = vmatprep.subr.mxu0 0.0
    %598 = vmatpush2.msra.mxu0 0.0
    %599 = vmatprep.subr.mxu0 0.0
    %600 = vmatpush2.msra.mxu0 0.0
    %601 = vmatprep.subr.mxu0 0.0
    %602 = vmatpush2.msra.mxu0 0.0
    %603 = vmatprep.subr.mxu0 0.0
    %604 = vmatpush2.msra.mxu0 0.0
    %605 = vmatprep.subr.mxu0 0.0
    %606 = vmatpush2.msra.mxu0 0.0
    %607 = vmatprep.subr.mxu0 0.0
    %608 = vmatpush2.msra.mxu0 0.0
    %609 = vmatprep.subr.mxu0 0.0
    %610 = vmatpush2.msra.mxu0 0.0
    %611 = vmatprep.subr.mxu0 0.0
    %612 = vmatpush2.msra.mxu0 0.0
    %613 = vmatprep.subr.mxu0 0.0
    %614 = vmatpush2.msra.mxu0 0.0
    %615 = vmatprep.subr.mxu0 0.0
    %616 = vmatpush2.msra.mxu0 0.0
    %617 = vmatprep.subr.mxu0 0.0
    %618 = vmatpush2.msra.mxu0 0.0
    %619 = vmatprep.subr.mxu0 0.0
    %620 = vmatpush2.msra.mxu0 0.0
    %621 = vmatprep.mubr.f32.mxu0 0.0
    %v622 = vand.u32 %v66, 4294901760
    %623 = vmatmul.mubr.f32.gmra.mxu0 %v622
    %v624 = vpop.f32.mrf.mxu0
    %v625 = vadd.f32 %v506, %v624
    %v626 = vpop.f32.mrf.mxu0
    %627 = vmatprep.mubr.f32.mxu0 0.0
    %v628 = vand.u32 %v69, 4294901760
    %629 = vmatmul.mubr.f32.gmra.mxu0 %v628
    %v630 = vpop.f32.mrf.mxu0
    %v631 = vadd.f32 %v514, %v630
    %v632 = vpop.f32.mrf.mxu0
    %633 = vmatprep.mubr.f32.mxu0 0.0
    %v634 = vand.u32 %v72, 4294901760
    %635 = vmatmul.mubr.f32.gmra.mxu0 %v634
    %v636 = vpop.f32.mrf.mxu0
    %v637 = vadd.f32 %v522, %v636
    %v638 = vpop.f32.mrf.mxu0
    %639 = vmatprep.mubr.f32.mxu0 0.0
    %v640 = vand.u32 %v75, 4294901760
    %641 = vmatmul.mubr.f32.gmra.mxu0 %v640
    %v642 = vpop.f32.mrf.mxu0
    %v643 = vadd.f32 %v530, %v642
    %v644 = vpop.f32.mrf.mxu0
    %645 = vdwg.mxu0
    %646 = vmatprep.subr.mxu0 0.0
    %647 = vmatpush1.msra.mxu0 0.0
    %648 = vmatprep.subr.mxu0 0.0
    %649 = vmatpush1.msra.mxu0 0.0
    %650 = vmatprep.subr.mxu0 0.0
    %651 = vmatpush1.msra.mxu0 0.0
    %652 = vmatprep.subr.mxu0 0.0
    %653 = vmatpush1.msra.mxu0 0.0
    %654 = vmatprep.subr.mxu0 0.0
    %655 = vmatpush1.msra.mxu0 0.0
    %656 = vmatprep.subr.mxu0 0.0
    %657 = vmatpush1.msra.mxu0 0.0
    %658 = vmatprep.subr.mxu0 0.0
    %659 = vmatpush1.msra.mxu0 0.0
    %660 = vmatprep.subr.mxu0 0.0
    %661 = vmatpush1.msra.mxu0 0.0
    %662 = vmatprep.subr.mxu0 0.0
    %v663 = vand.u32 %v63, 4294901760
    %664 = vmatpush1.msra.mxu0 %v663
    %665 = vmatprep.subr.mxu0 0.0
    %v666 = vand.u32 %v62, 4294901760
    %667 = vmatpush1.msra.mxu0 %v666
    %668 = vmatprep.subr.mxu0 0.0
    %v669 = vand.u32 %v61, 4294901760
    %670 = vmatpush1.msra.mxu0 %v669
    %671 = vmatprep.subr.mxu0 0.0
    %v672 = vand.u32 %v60, 4294901760
    %673 = vmatpush1.msra.mxu0 %v672
    %674 = vmatprep.subr.mxu0 0.0
    %v675 = vand.u32 %v59, 4294901760
    %676 = vmatpush1.msra.mxu0 %v675
    %677 = vmatprep.subr.mxu0 0.0
    %v678 = vand.u32 %v58, 4294901760
    %679 = vmatpush1.msra.mxu0 %v678
    %680 = vmatprep.subr.mxu0 0.0
    %v681 = vand.u32 %v57, 4294901760
    %682 = vmatpush1.msra.mxu0 %v681
    %683 = vmatprep.subr.mxu0 0.0
    %v684 = vand.u32 %v56, 4294901760
    %685 = vmatpush1.msra.mxu0 %v684
    %686 = vmatprep.subr.mxu0 0.0
    %687 = vmatpush2.msra.mxu0 0.0
    %688 = vmatprep.subr.mxu0 0.0
    %689 = vmatpush2.msra.mxu0 0.0
    %690 = vmatprep.subr.mxu0 0.0
    %691 = vmatpush2.msra.mxu0 0.0
    %692 = vmatprep.subr.mxu0 0.0
    %693 = vmatpush2.msra.mxu0 0.0
    %694 = vmatprep.subr.mxu0 0.0
    %695 = vmatpush2.msra.mxu0 0.0
    %696 = vmatprep.subr.mxu0 0.0
    %697 = vmatpush2.msra.mxu0 0.0
    %698 = vmatprep.subr.mxu0 0.0
    %699 = vmatpush2.msra.mxu0 0.0
    %700 = vmatprep.subr.mxu0 0.0
    %701 = vmatpush2.msra.mxu0 0.0
    %702 = vmatprep.subr.mxu0 0.0
    %703 = vmatpush2.msra.mxu0 0.0
    %704 = vmatprep.subr.mxu0 0.0
    %705 = vmatpush2.msra.mxu0 0.0
    %706 = vmatprep.subr.mxu0 0.0
    %707 = vmatpush2.msra.mxu0 0.0
    %708 = vmatprep.subr.mxu0 0.0
    %709 = vmatpush2.msra.mxu0 0.0
    %710 = vmatprep.subr.mxu0 0.0
    %711 = vmatpush2.msra.mxu0 0.0
    %712 = vmatprep.subr.mxu0 0.0
    %713 = vmatpush2.msra.mxu0 0.0
    %714 = vmatprep.subr.mxu0 0.0
    %715 = vmatpush2.msra.mxu0 0.0
    %716 = vmatprep.subr.mxu0 0.0
    %717 = vmatpush2.msra.mxu0 0.0
    %718 = vmatprep.mubr.f32.mxu0 0.0
    %v719 = vand.u32 %v66, 4294901760
    %720 = vmatmul.mubr.f32.gmra.mxu0 %v719
    %v721 = vpop.f32.mrf.mxu0
    %v722 = vadd.f32 %v625, %v721
    %v723 = vpop.f32.mrf.mxu0
    %724 = vmatprep.mubr.f32.mxu0 0.0
    %v725 = vand.u32 %v69, 4294901760
    %726 = vmatmul.mubr.f32.gmra.mxu0 %v725
    %v727 = vpop.f32.mrf.mxu0
    %v728 = vadd.f32 %v631, %v727
    %v729 = vpop.f32.mrf.mxu0
    %730 = vmatprep.mubr.f32.mxu0 0.0
    %v731 = vand.u32 %v72, 4294901760
    %732 = vmatmul.mubr.f32.gmra.mxu0 %v731
    %v733 = vpop.f32.mrf.mxu0
    %v734 = vadd.f32 %v637, %v733
    %v735 = vpop.f32.mrf.mxu0
    %736 = vmatprep.mubr.f32.mxu0 0.0
    %v737 = vand.u32 %v75, 4294901760
    %738 = vmatmul.mubr.f32.gmra.mxu0 %v737
    %v739 = vpop.f32.mrf.mxu0
    %v740 = vadd.f32 %v643, %v739
    %v741 = vpop.f32.mrf.mxu0
    %742 = vdwg.mxu0
    %743 = vst [vmem:[#allocation5] sm:$0xff] %v722
    %744 = vst [vmem:[#allocation5 + $0x8] sm:$0xff] %v728
    %745 = vst [vmem:[#allocation5 + $0x10] sm:$0xff] %v734
    %746 = vst [vmem:[#allocation5 + $0x18] sm:$0xff] %v740
    // Predicated region
    $region14: #{tpu_custom_call.1} parent=1 // pred_check
      _
    $region15: #{tpu_custom_call.1} parent=1 // pred_check_branch
      %748 = sbr.rel (0) target = $region17
    $region16: #{tpu_custom_call.1} parent=1 // pred_region
      %s750 = ssub.s32 512, 512
      %751 = vsyncadd [#allocation4], %s750
      %s752 = sshll.u32 [#allocation5], 4
      %s753 = int_to_ptr.vmem [resolvable:$true] %s752
      %758 = dma.vmem_to_hbm [thread:$0]  %s753, 512, %s2, [#allocation4], 128, 128, 8
    $region17: #{tpu_custom_call.1} parent=1 // pred_fallthru
      _
    // Predicated region
    $region18: #{tpu_custom_call.1} parent=1 // pred_check
      _
    $region19: #{tpu_custom_call.1} parent=1 // pred_check_branch
      %760 = sbr.rel (0) target = $region21
    $region20: #{tpu_custom_call.1} parent=1 // pred_region
      %761 = dma.done [#allocation4], 512
    $region21: #{tpu_custom_call.1} parent=1 // pred_fallthru
      _
    %762 = vsyncpa [#allocation3], 1
    %763 = vsyncpa [#allocation4], 1

</llo_original>
